<compile_context>
chip_gen: v5e
topology: v5e:2x2
jax: 0.10.0
libtpu: 0.0.40
codegen_flags: <defaults>
</compile_context>

<pallas_src>
import functools

import jax
import jax.numpy as jnp
from jax.experimental import pallas as pl
from jax.experimental.pallas import tpu as pltpu


def _round_up(v, m):
    return (v + m - 1) // m * m


def basic_block_kernel(x_ref, w1_ref, b1_ref, w2_ref, b2_ref, mask_ref,
                       o_ref, slab_ref, *, width):
    # x_ref   : (1, Cp, HW)     one image, channels padded to Cp (sublanes), f32
    # w1_ref  : (Cp, Cp)        1x1 conv weight * bn1 scale, bf16
    # b1_ref  : (Cp, 1)         folded BN1 bias, f32
    # w2_ref  : (Cp, 9*Cp)      3x3 conv weight * bn2 scale, taps stacked on
    #                           the contraction axis, bf16
    # b2_ref  : (Cp, 1)         folded BN2 bias, f32
    # mask_ref: (9, 1, HW)      per-tap boundary masks (1 inside, 0 at border)
    # o_ref   : (1, Cp, HW)     f32 output
    # slab_ref: (9*Cp, HW)      bf16 VMEM scratch: stacked conv2 taps
    x = x_ref[0]                                              # (Cp, HW) f32
    cp, hw = x.shape

    # ---- conv1 (1x1) + bn1 + leaky relu: one lane-dense bf16 MXU matmul ----
    h1 = jnp.dot(w1_ref[...], x.astype(jnp.bfloat16),
                 preferred_element_type=jnp.float32)          # (Cp, HW) f32
    h1 = h1 + b1_ref[...]
    h1 = jnp.where(h1 > 0, h1, 0.1 * h1)                      # (Cp, HW) f32

    # ---- build the (9*Cp, HW) tap slab for conv2 (3x3, stride 1, pad 1) ----
    # tap[c, y*W + x] = h1[c, (y+ky)*W + (x+kx)]; pltpu.roll wraps land exactly
    # on the out-of-image positions, which the precomputed mask zeroes.
    tap_idx = 0
    for ky in (-1, 0, 1):
        for kx in (-1, 0, 1):
            if ky == 0 and kx == 0:
                tap = h1                                      # center: no shift/mask
            else:
                shift = (-(ky * width + kx)) % hw
                tap = pltpu.roll(h1, shift, axis=1) * mask_ref[tap_idx]
            slab_ref[tap_idx * cp:(tap_idx + 1) * cp, :] = tap.astype(
                jnp.bfloat16)
            tap_idx += 1

    # ---- conv2 as a single deep-contraction MXU matmul ----
    out = jnp.dot(w2_ref[...], slab_ref[...],
                  preferred_element_type=jnp.float32)         # (Cp, HW) f32

    # ---- bn2 bias + leaky relu + residual add (all f32) ----
    out = out + b2_ref[...]
    out = jnp.where(out > 0, out, 0.1 * out)
    o_ref[0] = out + x                       # residual (requires C2 == Cin)


def basic_block_pallas(x_nchw, w1_oihw, s1, b1, w2_oihw, s2, b2):
    """Forward pass of the Darknet53 BasicBlock. Inputs/outputs are NCHW f32."""
    N, Cin, H, W = x_nchw.shape
    C1 = w1_oihw.shape[0]
    C2 = w2_oihw.shape[0]
    assert C2 == Cin, "residual add requires planes[1] == inplanes"
    HW = H * W
    # Round channels to 16 so bf16 slab chunk stores are (16,128)-tile aligned.
    Cp = _round_up(max(Cin, C1, C2), 16)

    # ---- layout packing (reshape + zero-pad only; no NCHW<->NHWC transpose) ----
    x = x_nchw.reshape(N, Cin, HW)
    x = jnp.pad(x, ((0, 0), (0, Cp - Cin), (0, 0)))           # (N, Cp, HW) f32

    # Fold BN scales into the conv weights (rows = out channels).
    w1 = w1_oihw[:, :, 0, 0] * s1[:, None]                    # (C1, Cin)
    w1 = jnp.pad(w1, ((0, Cp - C1), (0, Cp - Cin)))
    w1 = w1.astype(jnp.bfloat16)                              # (Cp, Cp) bf16

    w2 = jnp.transpose(w2_oihw, (2, 3, 0, 1))                 # (3, 3, C2, C1)
    w2 = w2 * s2[None, None, :, None]                         # fold bn2 scale
    w2 = jnp.pad(w2, ((0, 0), (0, 0), (0, Cp - C2), (0, Cp - C1)))
    # (Cp, 9*Cp): column block t = (ky+1)*3 + (kx+1) matches the kernel taps.
    w2 = jnp.transpose(w2, (2, 0, 1, 3)).reshape(Cp, 9 * Cp)
    w2 = w2.astype(jnp.bfloat16)

    def pad_cvec(v, c):
        return jnp.pad(v, (0, Cp - c)).reshape(Cp, 1).astype(jnp.float32)

    b1p, b2p = pad_cvec(b1, C1), pad_cvec(b2, C2)

    # Per-tap boundary masks for the 3x3 conv (precomputed so in-kernel mask
    # work is a single VPU multiply per non-center tap).
    yy = jnp.arange(H).reshape(H, 1)
    xx = jnp.arange(W).reshape(1, W)
    mask_list = []
    for ky in (-1, 0, 1):
        for kx in (-1, 0, 1):
            valid = ((yy + ky >= 0) & (yy + ky < H) &
                     (xx + kx >= 0) & (xx + kx < W))
            mask_list.append(valid.reshape(1, HW).astype(jnp.float32))
    masks = jnp.stack(mask_list, axis=0)                      # (9, 1, HW)

    def full_spec(shape):
        nd = len(shape)
        return pl.BlockSpec(shape, lambda n, _nd=nd: (0,) * _nd)

    kernel = functools.partial(basic_block_kernel, width=W)

    out = pl.pallas_call(
        kernel,
        out_shape=jax.ShapeDtypeStruct((N, Cp, HW), jnp.float32),
        grid_spec=pltpu.PrefetchScalarGridSpec(
            num_scalar_prefetch=0,
            grid=(N,),
            in_specs=[
                pl.BlockSpec((1, Cp, HW), lambda n: (n, 0, 0)),
                full_spec((Cp, Cp)),
                full_spec((Cp, 1)),
                full_spec((Cp, 9 * Cp)),
                full_spec((Cp, 1)),
                full_spec((9, 1, HW)),
            ],
            out_specs=pl.BlockSpec((1, Cp, HW), lambda n: (n, 0, 0)),
            scratch_shapes=[pltpu.VMEM((9 * Cp, HW), jnp.bfloat16)],
        ),
        compiler_params=pltpu.CompilerParams(
            dimension_semantics=("parallel",)),
    )(x, w1, b1p, w2, b2p, masks)

    return out[:, :C2, :].reshape(N, C2, H, W)


def reference_nchw(x, w1_oihw, s1, b1, w2_oihw, s2, b2):
    dn = ("NCHW", "OIHW", "NCHW")
    h = jax.lax.conv_general_dilated(x, w1_oihw, (1, 1), "VALID",
                                     dimension_numbers=dn)
    h = h * s1.reshape(1, -1, 1, 1) + b1.reshape(1, -1, 1, 1)
    h = jnp.where(h > 0, h, 0.1 * h)
    o = jax.lax.conv_general_dilated(h, w2_oihw, (1, 1), "SAME",
                                     dimension_numbers=dn)
    o = o * s2.reshape(1, -1, 1, 1) + b2.reshape(1, -1, 1, 1)
    o = jnp.where(o > 0, o, 0.1 * o)
    return o + x


if __name__ == "__main__":
    # BasicBlock(inplanes=4, planes=(2, 4)) at small shapes.
    N, Cin, H, W = 2, 4, 16, 16
    C1, C2 = 2, 4
    eps = 1e-5

    key = jax.random.PRNGKey(0)
    k = jax.random.split(key, 12)

    x_nchw = jax.random.normal(k[0], (N, Cin, H, W), jnp.float32)

    # Conv weights in PyTorch OIHW layout, no bias (as in the module).
    w1_oihw = jax.random.normal(k[1], (C1, Cin, 1, 1), jnp.float32) * 0.1
    w2_oihw = jax.random.normal(k[2], (C2, C1, 3, 3), jnp.float32) * 0.1

    # BatchNorm parameters (eval semantics), folded into scale/bias.
    g1 = jax.random.uniform(k[3], (C1,), jnp.float32, 0.5, 1.5)
    be1 = jax.random.normal(k[4], (C1,), jnp.float32) * 0.1
    m1 = jax.random.normal(k[5], (C1,), jnp.float32) * 0.1
    v1 = jax.random.uniform(k[6], (C1,), jnp.float32, 0.5, 1.5)
    g2 = jax.random.uniform(k[7], (C2,), jnp.float32, 0.5, 1.5)
    be2 = jax.random.normal(k[8], (C2,), jnp.float32) * 0.1
    m2 = jax.random.normal(k[9], (C2,), jnp.float32) * 0.1
    v2 = jax.random.uniform(k[10], (C2,), jnp.float32, 0.5, 1.5)

    s1 = g1 / jnp.sqrt(v1 + eps)
    b1 = be1 - m1 * s1
    s2 = g2 / jnp.sqrt(v2 + eps)
    b2 = be2 - m2 * s2

    out = basic_block_pallas(x_nchw, w1_oihw, s1, b1, w2_oihw, s2, b2)
    out = jax.block_until_ready(out)

    ref = reference_nchw(x_nchw, w1_oihw, s1, b1, w2_oihw, s2, b2)
    assert out.shape == (N, C2, H, W)
    # bf16 MXU operands (f32 accumulation) -> slightly looser tolerance.
    assert jnp.allclose(out, ref, atol=1e-2, rtol=1e-2), (
        float(jnp.max(jnp.abs(out - ref))))

    print("KERNEL_OK")
</pallas_src>

<mosaic_0001>
module attributes {stable_mosaic.version = 11 : i64} {
  func.func @basic_block_kernel(%arg0: i32, %arg1: memref<1x16x256xf32, #tpu.memory_space<vmem>>, %arg2: memref<16x16xbf16, #tpu.memory_space<vmem>>, %arg3: memref<16x1xf32, #tpu.memory_space<vmem>>, %arg4: memref<16x144xbf16, #tpu.memory_space<vmem>>, %arg5: memref<16x1xf32, #tpu.memory_space<vmem>>, %arg6: memref<9x1x256xf32, #tpu.memory_space<vmem>>, %arg7: memref<1x16x256xf32, #tpu.memory_space<vmem>>, %arg8: memref<144x256xbf16, #tpu.memory_space<vmem>>) attributes {dimension_semantics = [#tpu.dimension_semantics<parallel>], iteration_bounds = array<i64: 2>, scalar_prefetch = 0 : i64, scratch_operands = 1 : i64, tpu.core_type = #tpu.core_type<tc>, window_params = [{transform_indices = @transform_0, window_bounds = array<i64: 1, 16, 256>}, {pipeline_mode = #tpu.pipeline_mode<synchronous>, transform_indices = @transform_1, window_bounds = array<i64: 16, 16>}, {pipeline_mode = #tpu.pipeline_mode<synchronous>, transform_indices = @transform_2, window_bounds = array<i64: 16, 1>}, {pipeline_mode = #tpu.pipeline_mode<synchronous>, transform_indices = @transform_3, window_bounds = array<i64: 16, 144>}, {pipeline_mode = #tpu.pipeline_mode<synchronous>, transform_indices = @transform_4, window_bounds = array<i64: 16, 1>}, {pipeline_mode = #tpu.pipeline_mode<synchronous>, transform_indices = @transform_5, window_bounds = array<i64: 9, 1, 256>}, {transform_indices = @transform_6, window_bounds = array<i64: 1, 16, 256>}]} {
    %c0 = arith.constant 0 : index
    %c0_0 = arith.constant 0 : index
    %c0_1 = arith.constant 0 : index
    %0 = vector.load %arg1[%c0, %c0_0, %c0_1] : memref<1x16x256xf32, #tpu.memory_space<vmem>>, vector<1x16x256xf32>
    %1 = vector.shape_cast %0 : vector<1x16x256xf32> to vector<16x256xf32>
    %c0_2 = arith.constant 0 : index
    %c0_3 = arith.constant 0 : index
    %2 = vector.load %arg2[%c0_2, %c0_3] : memref<16x16xbf16, #tpu.memory_space<vmem>>, vector<16x16xbf16>
    %3 = arith.truncf %1 : vector<16x256xf32> to vector<16x256xbf16>
    %cst = arith.constant dense<0.000000e+00> : vector<16x256xf32>
    %4 = tpu.matmul %2, %3, %cst {dimension_numbers = #tpu.dot_dimension_numbers<[1], [0], [0], [1], [0, 0, 1, 1], [], []>} : vector<16x16xbf16>, vector<16x256xbf16>, vector<16x256xf32> -> vector<16x256xf32>
    %c0_4 = arith.constant 0 : index
    %c0_5 = arith.constant 0 : index
    %5 = vector.load %arg3[%c0_4, %c0_5] : memref<16x1xf32, #tpu.memory_space<vmem>>, vector<16x1xf32>
    %6 = vector.broadcast %5 : vector<16x1xf32> to vector<16x256xf32>
    %7 = arith.addf %4, %6 : vector<16x256xf32>
    %cst_6 = arith.constant 0.000000e+00 : f32
    %8 = vector.broadcast %cst_6 : f32 to vector<16x256xf32>
    %9 = arith.cmpf ogt, %7, %8 : vector<16x256xf32>
    %cst_7 = arith.constant 1.000000e-01 : f32
    %10 = vector.broadcast %cst_7 : f32 to vector<16x256xf32>
    %11 = arith.mulf %10, %7 : vector<16x256xf32>
    %12 = arith.select %9, %7, %11 : vector<16x256xi1>, vector<16x256xf32>
    %c17_i32 = arith.constant 17 : i32
    %13 = tpu.dynamic_rotate %12 by %c17_i32 dim 1 : vector<16x256xf32>, i32 -> vector<16x256xf32>
    %c0_8 = arith.constant 0 : index
    %c0_9 = arith.constant 0 : index
    %c0_10 = arith.constant 0 : index
    %14 = vector.load %arg6[%c0_8, %c0_9, %c0_10] : memref<9x1x256xf32, #tpu.memory_space<vmem>>, vector<1x1x256xf32>
    %15 = vector.shape_cast %14 : vector<1x1x256xf32> to vector<1x256xf32>
    %16 = vector.broadcast %15 : vector<1x256xf32> to vector<16x256xf32>
    %17 = arith.mulf %13, %16 : vector<16x256xf32>
    %18 = arith.truncf %17 : vector<16x256xf32> to vector<16x256xbf16>
    %c0_11 = arith.constant 0 : index
    %c0_12 = arith.constant 0 : index
    %19 = vector.load %arg8[%c0_11, %c0_12] : memref<144x256xbf16, #tpu.memory_space<vmem>>, vector<16x256xbf16>
    tpu.vector_store %arg8[%c0_11, %c0_12], %18 {strides = array<i32>} : memref<144x256xbf16, #tpu.memory_space<vmem>>, vector<16x256xbf16>,
    %c16_i32 = arith.constant 16 : i32
    %20 = tpu.dynamic_rotate %12 by %c16_i32 dim 1 : vector<16x256xf32>, i32 -> vector<16x256xf32>
    %c1 = arith.constant 1 : index
    %c0_13 = arith.constant 0 : index
    %c0_14 = arith.constant 0 : index
    %21 = vector.load %arg6[%c1, %c0_13, %c0_14] : memref<9x1x256xf32, #tpu.memory_space<vmem>>, vector<1x1x256xf32>
    %22 = vector.shape_cast %21 : vector<1x1x256xf32> to vector<1x256xf32>
    %23 = vector.broadcast %22 : vector<1x256xf32> to vector<16x256xf32>
    %24 = arith.mulf %20, %23 : vector<16x256xf32>
    %25 = arith.truncf %24 : vector<16x256xf32> to vector<16x256xbf16>
    %c16 = arith.constant 16 : index
    %c0_15 = arith.constant 0 : index
    %26 = vector.load %arg8[%c16, %c0_15] : memref<144x256xbf16, #tpu.memory_space<vmem>>, vector<16x256xbf16>
    tpu.vector_store %arg8[%c16, %c0_15], %25 {strides = array<i32>} : memref<144x256xbf16, #tpu.memory_space<vmem>>, vector<16x256xbf16>,
    %c15_i32 = arith.constant 15 : i32
    %27 = tpu.dynamic_rotate %12 by %c15_i32 dim 1 : vector<16x256xf32>, i32 -> vector<16x256xf32>
    %c2 = arith.constant 2 : index
    %c0_16 = arith.constant 0 : index
    %c0_17 = arith.constant 0 : index
    %28 = vector.load %arg6[%c2, %c0_16, %c0_17] : memref<9x1x256xf32, #tpu.memory_space<vmem>>, vector<1x1x256xf32>
    %29 = vector.shape_cast %28 : vector<1x1x256xf32> to vector<1x256xf32>
    %30 = vector.broadcast %29 : vector<1x256xf32> to vector<16x256xf32>
    %31 = arith.mulf %27, %30 : vector<16x256xf32>
    %32 = arith.truncf %31 : vector<16x256xf32> to vector<16x256xbf16>
    %c32 = arith.constant 32 : index
    %c0_18 = arith.constant 0 : index
    %33 = vector.load %arg8[%c32, %c0_18] : memref<144x256xbf16, #tpu.memory_space<vmem>>, vector<16x256xbf16>
    tpu.vector_store %arg8[%c32, %c0_18], %32 {strides = array<i32>} : memref<144x256xbf16, #tpu.memory_space<vmem>>, vector<16x256xbf16>,
    %c1_i32 = arith.constant 1 : i32
    %34 = tpu.dynamic_rotate %12 by %c1_i32 dim 1 : vector<16x256xf32>, i32 -> vector<16x256xf32>
    %c3 = arith.constant 3 : index
    %c0_19 = arith.constant 0 : index
    %c0_20 = arith.constant 0 : index
    %35 = vector.load %arg6[%c3, %c0_19, %c0_20] : memref<9x1x256xf32, #tpu.memory_space<vmem>>, vector<1x1x256xf32>
    %36 = vector.shape_cast %35 : vector<1x1x256xf32> to vector<1x256xf32>
    %37 = vector.broadcast %36 : vector<1x256xf32> to vector<16x256xf32>
    %38 = arith.mulf %34, %37 : vector<16x256xf32>
    %39 = arith.truncf %38 : vector<16x256xf32> to vector<16x256xbf16>
    %c48 = arith.constant 48 : index
    %c0_21 = arith.constant 0 : index
    %40 = vector.load %arg8[%c48, %c0_21] : memref<144x256xbf16, #tpu.memory_space<vmem>>, vector<16x256xbf16>
    tpu.vector_store %arg8[%c48, %c0_21], %39 {strides = array<i32>} : memref<144x256xbf16, #tpu.memory_space<vmem>>, vector<16x256xbf16>,
    %41 = arith.truncf %12 : vector<16x256xf32> to vector<16x256xbf16>
    %c64 = arith.constant 64 : index
    %c0_22 = arith.constant 0 : index
    %42 = vector.load %arg8[%c64, %c0_22] : memref<144x256xbf16, #tpu.memory_space<vmem>>, vector<16x256xbf16>
    tpu.vector_store %arg8[%c64, %c0_22], %41 {strides = array<i32>} : memref<144x256xbf16, #tpu.memory_space<vmem>>, vector<16x256xbf16>,
    %c255_i32 = arith.constant 255 : i32
    %43 = tpu.dynamic_rotate %12 by %c255_i32 dim 1 : vector<16x256xf32>, i32 -> vector<16x256xf32>
    %c5 = arith.constant 5 : index
    %c0_23 = arith.constant 0 : index
    %c0_24 = arith.constant 0 : index
    %44 = vector.load %arg6[%c5, %c0_23, %c0_24] : memref<9x1x256xf32, #tpu.memory_space<vmem>>, vector<1x1x256xf32>
    %45 = vector.shape_cast %44 : vector<1x1x256xf32> to vector<1x256xf32>
    %46 = vector.broadcast %45 : vector<1x256xf32> to vector<16x256xf32>
    %47 = arith.mulf %43, %46 : vector<16x256xf32>
    %48 = arith.truncf %47 : vector<16x256xf32> to vector<16x256xbf16>
    %c80 = arith.constant 80 : index
    %c0_25 = arith.constant 0 : index
    %49 = vector.load %arg8[%c80, %c0_25] : memref<144x256xbf16, #tpu.memory_space<vmem>>, vector<16x256xbf16>
    tpu.vector_store %arg8[%c80, %c0_25], %48 {strides = array<i32>} : memref<144x256xbf16, #tpu.memory_space<vmem>>, vector<16x256xbf16>,
    %c241_i32 = arith.constant 241 : i32
    %50 = tpu.dynamic_rotate %12 by %c241_i32 dim 1 : vector<16x256xf32>, i32 -> vector<16x256xf32>
    %c6 = arith.constant 6 : index
    %c0_26 = arith.constant 0 : index
    %c0_27 = arith.constant 0 : index
    %51 = vector.load %arg6[%c6, %c0_26, %c0_27] : memref<9x1x256xf32, #tpu.memory_space<vmem>>, vector<1x1x256xf32>
    %52 = vector.shape_cast %51 : vector<1x1x256xf32> to vector<1x256xf32>
    %53 = vector.broadcast %52 : vector<1x256xf32> to vector<16x256xf32>
    %54 = arith.mulf %50, %53 : vector<16x256xf32>
    %55 = arith.truncf %54 : vector<16x256xf32> to vector<16x256xbf16>
    %c96 = arith.constant 96 : index
    %c0_28 = arith.constant 0 : index
    %56 = vector.load %arg8[%c96, %c0_28] : memref<144x256xbf16, #tpu.memory_space<vmem>>, vector<16x256xbf16>
    tpu.vector_store %arg8[%c96, %c0_28], %55 {strides = array<i32>} : memref<144x256xbf16, #tpu.memory_space<vmem>>, vector<16x256xbf16>,
    %c240_i32 = arith.constant 240 : i32
    %57 = tpu.dynamic_rotate %12 by %c240_i32 dim 1 : vector<16x256xf32>, i32 -> vector<16x256xf32>
    %c7 = arith.constant 7 : index
    %c0_29 = arith.constant 0 : index
    %c0_30 = arith.constant 0 : index
    %58 = vector.load %arg6[%c7, %c0_29, %c0_30] : memref<9x1x256xf32, #tpu.memory_space<vmem>>, vector<1x1x256xf32>
    %59 = vector.shape_cast %58 : vector<1x1x256xf32> to vector<1x256xf32>
    %60 = vector.broadcast %59 : vector<1x256xf32> to vector<16x256xf32>
    %61 = arith.mulf %57, %60 : vector<16x256xf32>
    %62 = arith.truncf %61 : vector<16x256xf32> to vector<16x256xbf16>
    %c112 = arith.constant 112 : index
    %c0_31 = arith.constant 0 : index
    %63 = vector.load %arg8[%c112, %c0_31] : memref<144x256xbf16, #tpu.memory_space<vmem>>, vector<16x256xbf16>
    tpu.vector_store %arg8[%c112, %c0_31], %62 {strides = array<i32>} : memref<144x256xbf16, #tpu.memory_space<vmem>>, vector<16x256xbf16>,
    %c239_i32 = arith.constant 239 : i32
    %64 = tpu.dynamic_rotate %12 by %c239_i32 dim 1 : vector<16x256xf32>, i32 -> vector<16x256xf32>
    %c8 = arith.constant 8 : index
    %c0_32 = arith.constant 0 : index
    %c0_33 = arith.constant 0 : index
    %65 = vector.load %arg6[%c8, %c0_32, %c0_33] : memref<9x1x256xf32, #tpu.memory_space<vmem>>, vector<1x1x256xf32>
    %66 = vector.shape_cast %65 : vector<1x1x256xf32> to vector<1x256xf32>
    %67 = vector.broadcast %66 : vector<1x256xf32> to vector<16x256xf32>
    %68 = arith.mulf %64, %67 : vector<16x256xf32>
    %69 = arith.truncf %68 : vector<16x256xf32> to vector<16x256xbf16>
    %c128 = arith.constant 128 : index
    %c0_34 = arith.constant 0 : index
    %70 = vector.load %arg8[%c128, %c0_34] : memref<144x256xbf16, #tpu.memory_space<vmem>>, vector<16x256xbf16>
    tpu.vector_store %arg8[%c128, %c0_34], %69 {strides = array<i32>} : memref<144x256xbf16, #tpu.memory_space<vmem>>, vector<16x256xbf16>,
    %c0_35 = arith.constant 0 : index
    %c0_36 = arith.constant 0 : index
    %71 = vector.load %arg4[%c0_35, %c0_36] : memref<16x144xbf16, #tpu.memory_space<vmem>>, vector<16x144xbf16>
    %c0_37 = arith.constant 0 : index
    %c0_38 = arith.constant 0 : index
    %72 = vector.load %arg8[%c0_37, %c0_38] : memref<144x256xbf16, #tpu.memory_space<vmem>>, vector<144x256xbf16>
    %cst_39 = arith.constant dense<0.000000e+00> : vector<16x256xf32>
    %73 = tpu.matmul %71, %72, %cst_39 {dimension_numbers = #tpu.dot_dimension_numbers<[1], [0], [0], [1], [0, 0, 1, 1], [], []>} : vector<16x144xbf16>, vector<144x256xbf16>, vector<16x256xf32> -> vector<16x256xf32>
    %c0_40 = arith.constant 0 : index
    %c0_41 = arith.constant 0 : index
    %74 = vector.load %arg5[%c0_40, %c0_41] : memref<16x1xf32, #tpu.memory_space<vmem>>, vector<16x1xf32>
    %75 = vector.broadcast %74 : vector<16x1xf32> to vector<16x256xf32>
    %76 = arith.addf %73, %75 : vector<16x256xf32>
    %cst_42 = arith.constant 0.000000e+00 : f32
    %77 = vector.broadcast %cst_42 : f32 to vector<16x256xf32>
    %78 = arith.cmpf ogt, %76, %77 : vector<16x256xf32>
    %cst_43 = arith.constant 1.000000e-01 : f32
    %79 = vector.broadcast %cst_43 : f32 to vector<16x256xf32>
    %80 = arith.mulf %79, %76 : vector<16x256xf32>
    %81 = arith.select %78, %76, %80 : vector<16x256xi1>, vector<16x256xf32>
    %82 = arith.addf %81, %1 : vector<16x256xf32>
    %c0_44 = arith.constant 0 : index
    %c0_45 = arith.constant 0 : index
    %c0_46 = arith.constant 0 : index
    %83 = vector.load %arg7[%c0_44, %c0_45, %c0_46] : memref<1x16x256xf32, #tpu.memory_space<vmem>>, vector<1x16x256xf32>
    %84 = vector.shape_cast %83 : vector<1x16x256xf32> to vector<16x256xf32>
    %85 = vector.shape_cast %82 : vector<16x256xf32> to vector<1x16x256xf32>
    tpu.vector_store %arg7[%c0_44, %c0_45, %c0_46], %85 {strides = array<i32>} : memref<1x16x256xf32, #tpu.memory_space<vmem>>, vector<1x16x256xf32>,
    return
  }
  func.func @transform_0(%arg0: i32) -> (i32, i32, i32) {
    %c0_i32 = arith.constant 0 : i32
    %c0_i32_0 = arith.constant 0 : i32
    %c0_i32_1 = arith.constant 0 : i32
    return %arg0, %c0_i32, %c0_i32_0 : i32, i32, i32
  }
  func.func @transform_1(%arg0: i32) -> (i32, i32) {
    %c0_i32 = arith.constant 0 : i32
    %c0_i32_0 = arith.constant 0 : i32
    %c0_i32_1 = arith.constant 0 : i32
    return %c0_i32, %c0_i32_0 : i32, i32
  }
  func.func @transform_2(%arg0: i32) -> (i32, i32) {
    %c0_i32 = arith.constant 0 : i32
    %c0_i32_0 = arith.constant 0 : i32
    %c0_i32_1 = arith.constant 0 : i32
    return %c0_i32, %c0_i32_0 : i32, i32
  }
  func.func @transform_3(%arg0: i32) -> (i32, i32) {
    %c0_i32 = arith.constant 0 : i32
    %c0_i32_0 = arith.constant 0 : i32
    %c0_i32_1 = arith.constant 0 : i32
    return %c0_i32, %c0_i32_0 : i32, i32
  }
  func.func @transform_4(%arg0: i32) -> (i32, i32) {
    %c0_i32 = arith.constant 0 : i32
    %c0_i32_0 = arith.constant 0 : i32
    %c0_i32_1 = arith.constant 0 : i32
    return %c0_i32, %c0_i32_0 : i32, i32
  }
  func.func @transform_5(%arg0: i32) -> (i32, i32, i32) {
    %c0_i32 = arith.constant 0 : i32
    %c0_i32_0 = arith.constant 0 : i32
    %c0_i32_1 = arith.constant 0 : i32
    %c0_i32_2 = arith.constant 0 : i32
    return %c0_i32, %c0_i32_0, %c0_i32_1 : i32, i32, i32
  }
  func.func @transform_6(%arg0: i32) -> (i32, i32, i32) {
    %c0_i32 = arith.constant 0 : i32
    %c0_i32_0 = arith.constant 0 : i32
    %c0_i32_1 = arith.constant 0 : i32
    return %arg0, %c0_i32, %c0_i32_0 : i32, i32, i32
  }
}

</mosaic_0001>

<llo_original>
// kernel: tpu_custom_call.1
$region0: #{tpu_custom_call.1}
  #allocation0 [shape = 'u32[]', space=smem, size = 0x4, offset = 0x4, fixed_abs, tag = 'smem constant byte address 0x4 - core index']
  #allocation1 [shape = 'u32[72,128]{1,0:T(1,128)}', space=vmem, size = 0x9000, scoped, tag = 'internal scratch']
  #allocation2 [shape = 'bf16[144,256]{1,0:T(8,128)(2,1)}', space=vmem, size = 0x12000, scoped, tag = 'scratch operand']
  %s0 = inlined_call_operand.hbm [shape: f32[2,16,256], index: 0, kind: input, shape index: {}]
  %s1 = inlined_call_operand.vmem [shape: bf16[16,16], index: 1, kind: input, shape index: {}]
  %s2 = inlined_call_operand.vmem [shape: f32[16,1], index: 2, kind: input, shape index: {}]
  %s3 = inlined_call_operand.hbm [shape: bf16[16,144], index: 3, kind: input, shape index: {}]
  %s4 = inlined_call_operand.vmem [shape: f32[16,1], index: 4, kind: input, shape index: {}]
  %s5 = inlined_call_operand.vmem [shape: f32[9,1,256], index: 5, kind: input, shape index: {}]
  %s6 = inlined_call_operand.hbm [shape: f32[2,16,256], index: 6, kind: output, shape index: {}]
  %s7 = sld [smem:[#allocation0]]
  $region65: #{tpu_custom_call.1} parent=0
    _
  %s9 = ssub.s32 1, %s7
  %s10 = scalar_select 0, %s9, %s7
  $region1: #{tpu_custom_call.1} parent=0
    #allocation3 [shape = 'u8[32768]{0}', space=vmem, size = 0x8000, scoped, tag = 'input window, operand 0']
    #allocation4 [shape = 's32[2]{0}', space=sflag, size = 0x8, scoped, tag = 'scoped memory for tpu_custom_call.1']
    #allocation5 [shape = 's32[2]{0}', space=sflag, size = 0x8, scoped, tag = 'scoped memory for tpu_custom_call.1']
    #allocation6 [shape = 'u8[8192]{0}', space=vmem, size = 0x2000, scoped, tag = 'input window, operand 3, single buffered']
    #allocation7 [shape = 's32[1]{0}', space=sflag, size = 0x4, scoped, tag = 'scoped memory for tpu_custom_call.1']
    #allocation8 [shape = 'u8[32768]{0}', space=vmem, size = 0x8000, scoped, tag = 'output window, operand 0']
    %11 = vsyncpa [#allocation4], 0
    %s12 = scalar_lea.sflag [#allocation4], 1
    %13 = vsyncpa %s12, 0
    %14 = vsyncpa [#allocation7], 0
    %15 = vsyncpa [#allocation5], 0
    %s16 = scalar_lea.sflag [#allocation5], 1
    %17 = vsyncpa %s16, 0
    loop: start=0, step=1, limit=4
    $region2: #{tpu_custom_call.1} parent=1 // loop_pre_header
      _
    $region3: #{tpu_custom_call.1} parent=1 // loop_header
      %s19 = sphi 0, %s23
      %p20 = scmp.ge.s32.totalorder %s19, 4
      %s29 = sphi 0, %s31
      %s32 = sphi 0, %s29
      %s33 = sphi 0, %s32
      %s49 = sphi 0, %s33
      %s53 = sphi 0, %s53
      %s55 = sphi 0, %s53
      %s56 = sphi 0, %s55
      %s70 = sphi 0, %s56
      %s74 = sphi 0, %s74
      %s76 = sphi 0, %s74
      %s77 = sphi 0, %s76
      %s91 = sphi 0, %s77
      %s95 = sphi 0, %s95
      %s97 = sphi 0, %s95
      %s98 = sphi 0, %s97
      %s112 = sphi 0, %s98
      %s116 = sphi 0, %s116
      %s118 = sphi 0, %s116
      %s119 = sphi 0, %s118
      %s133 = sphi 0, %s119
      %s137 = sphi 0, %s137
      %s139 = sphi 0, %s137
      %s140 = sphi 0, %s139
      %s154 = sphi 0, %s140
      %s160 = sphi 0, %s162
      %s163 = sphi 0, %s160
      %s164 = sphi 0, %s163
      %s180 = sphi 0, %s164
    $region4: #{tpu_custom_call.1} parent=1 // loop_header_branch
      %22 = sbr.rel (%p20) target = $region8
    $region5: #{tpu_custom_call.1} parent=1 // loop_body
      %s24 = ssub.s32 %s19, 1
      %s25 = ssub.s32 %s19, 2
      %s26 = sadd.s32 %s19, 1
      %s27 = ssub.s32 %s19, %s26
      %p28 = scmp.eq.s32.totalorder %s27, 0
      %s30 = sadd.s32 %s29, 1
      %s31 = scalar_select %p28, %s29, %s30
      %p34 = pneg %p28
      %p35 = scmp.eq.s32.totalorder %s19, 1
      %p36 = por %p34, %p35
      %p37 = scmp.ne.s32.totalorder %s29, %s32
      %p38 = scmp.eq.s32.totalorder %s19, 0
      %p39 = por %p37, %p38
      %p40 = scmp.ne.s32.totalorder %s29, %s32
      %p41 = scmp.eq.s32.totalorder %s24, 1
      %p42 = por %p40, %p41
      %p43 = scmp.ne.s32.totalorder %s32, %s33
      %p44 = scmp.eq.s32.totalorder %s24, 0
      %p45 = por %p43, %p44
      %p46 = scmp.ne.s32.totalorder %s32, %s33
      %p47 = scmp.eq.s32.totalorder %s25, 1
      %p48 = por %p46, %p47
      %p50 = scmp.ne.s32.totalorder %s33, %s49
      %p51 = scmp.eq.s32.totalorder %s25, 0
      %p52 = por %p50, %p51
      %s54 = sadd.s32 %s53, 1
      %p57 = scmp.eq.s32.totalorder %s19, 1
      %p58 = scmp.ne.s32.totalorder %s53, %s55
      %p59 = scmp.eq.s32.totalorder %s19, 0
      %p60 = por %p58, %p59
      %p61 = scmp.ne.s32.totalorder %s53, %s55
      %p62 = scmp.eq.s32.totalorder %s24, 1
      %p63 = por %p61, %p62
      %p64 = scmp.ne.s32.totalorder %s55, %s56
      %p65 = scmp.eq.s32.totalorder %s24, 0
      %p66 = por %p64, %p65
      %p67 = scmp.ne.s32.totalorder %s55, %s56
      %p68 = scmp.eq.s32.totalorder %s25, 1
      %p69 = por %p67, %p68
      %p71 = scmp.ne.s32.totalorder %s56, %s70
      %p72 = scmp.eq.s32.totalorder %s25, 0
      %p73 = por %p71, %p72
      %s75 = sadd.s32 %s74, 1
      %p78 = scmp.eq.s32.totalorder %s19, 1
      %p79 = scmp.ne.s32.totalorder %s74, %s76
      %p80 = scmp.eq.s32.totalorder %s19, 0
      %p81 = por %p79, %p80
      %p82 = scmp.ne.s32.totalorder %s74, %s76
      %p83 = scmp.eq.s32.totalorder %s24, 1
      %p84 = por %p82, %p83
      %p85 = scmp.ne.s32.totalorder %s76, %s77
      %p86 = scmp.eq.s32.totalorder %s24, 0
      %p87 = por %p85, %p86
      %p88 = scmp.ne.s32.totalorder %s76, %s77
      %p89 = scmp.eq.s32.totalorder %s25, 1
      %p90 = por %p88, %p89
      %p92 = scmp.ne.s32.totalorder %s77, %s91
      %p93 = scmp.eq.s32.totalorder %s25, 0
      %p94 = por %p92, %p93
      %s96 = sadd.s32 %s95, 1
      %p99 = scmp.eq.s32.totalorder %s19, 1
      %p100 = scmp.ne.s32.totalorder %s95, %s97
      %p101 = scmp.eq.s32.totalorder %s19, 0
      %p102 = por %p100, %p101
      %p103 = scmp.ne.s32.totalorder %s95, %s97
      %p104 = scmp.eq.s32.totalorder %s24, 1
      %p105 = por %p103, %p104
      %p106 = scmp.ne.s32.totalorder %s97, %s98
      %p107 = scmp.eq.s32.totalorder %s24, 0
      %p108 = por %p106, %p107
      %p109 = scmp.ne.s32.totalorder %s97, %s98
      %p110 = scmp.eq.s32.totalorder %s25, 1
      %p111 = por %p109, %p110
      %p113 = scmp.ne.s32.totalorder %s98, %s112
      %p114 = scmp.eq.s32.totalorder %s25, 0
      %p115 = por %p113, %p114
      %s117 = sadd.s32 %s116, 1
      %p120 = scmp.eq.s32.totalorder %s19, 1
      %p121 = scmp.ne.s32.totalorder %s116, %s118
      %p122 = scmp.eq.s32.totalorder %s19, 0
      %p123 = por %p121, %p122
      %p124 = scmp.ne.s32.totalorder %s116, %s118
      %p125 = scmp.eq.s32.totalorder %s24, 1
      %p126 = por %p124, %p125
      %p127 = scmp.ne.s32.totalorder %s118, %s119
      %p128 = scmp.eq.s32.totalorder %s24, 0
      %p129 = por %p127, %p128
      %p130 = scmp.ne.s32.totalorder %s118, %s119
      %p131 = scmp.eq.s32.totalorder %s25, 1
      %p132 = por %p130, %p131
      %p134 = scmp.ne.s32.totalorder %s119, %s133
      %p135 = scmp.eq.s32.totalorder %s25, 0
      %p136 = por %p134, %p135
      %s138 = sadd.s32 %s137, 1
      %p141 = scmp.eq.s32.totalorder %s19, 1
      %p142 = scmp.ne.s32.totalorder %s137, %s139
      %p143 = scmp.eq.s32.totalorder %s19, 0
      %p144 = por %p142, %p143
      %p145 = scmp.ne.s32.totalorder %s137, %s139
      %p146 = scmp.eq.s32.totalorder %s24, 1
      %p147 = por %p145, %p146
      %p148 = scmp.ne.s32.totalorder %s139, %s140
      %p149 = scmp.eq.s32.totalorder %s24, 0
      %p150 = por %p148, %p149
      %p151 = scmp.ne.s32.totalorder %s139, %s140
      %p152 = scmp.eq.s32.totalorder %s25, 1
      %p153 = por %p151, %p152
      %p155 = scmp.ne.s32.totalorder %s140, %s154
      %p156 = scmp.eq.s32.totalorder %s25, 0
      %p157 = por %p155, %p156
      %s158 = ssub.s32 %s19, %s26
      %p159 = scmp.eq.s32.totalorder %s158, 0
      %s161 = sadd.s32 %s160, 1
      %s162 = scalar_select %p159, %s160, %s161
      %p165 = pneg %p159
      %p166 = scmp.eq.s32.totalorder %s19, 1
      %p167 = por %p165, %p166
      %p168 = scmp.ne.s32.totalorder %s160, %s163
      %p169 = scmp.eq.s32.totalorder %s19, 0
      %p170 = por %p168, %p169
      %p171 = scmp.ne.s32.totalorder %s160, %s163
      %p172 = scmp.eq.s32.totalorder %s24, 1
      %p173 = por %p171, %p172
      %p174 = scmp.ne.s32.totalorder %s163, %s164
      %p175 = scmp.eq.s32.totalorder %s24, 0
      %p176 = por %p174, %p175
      %p177 = scmp.ne.s32.totalorder %s163, %s164
      %p178 = scmp.eq.s32.totalorder %s25, 1
      %p179 = por %p177, %p178
      %p181 = scmp.ne.s32.totalorder %s164, %s180
      %p182 = scmp.eq.s32.totalorder %s25, 0
      %p183 = por %p181, %p182
      %p184 = scmp.le.s32.totalorder 1, %s19
      %p185 = scmp.lt.s32.totalorder %s19, 3
      %p186 = pnand %p184, %p185
      %p187 = pneg %p186
      // Predicated region
      $region9: #{tpu_custom_call.1} parent=5 // pred_check
        _
      $region10: #{tpu_custom_call.1} parent=5 // pred_check_branch
        %189 = sbr.rel (%p186) target = $region12
      $region11: #{tpu_custom_call.1} parent=5 // pred_region
        %s190 = ssub.s32 %s19, 1
        // Predicated region
        $region13: #{tpu_custom_call.1} parent=11 // pred_check
          %p191 = pneg %p66
        $region14: #{tpu_custom_call.1} parent=11 // pred_check_branch
          %193 = sbr.rel (%p191) target = $region16
        $region15: #{tpu_custom_call.1} parent=11 // pred_region
          _
        $region16: #{tpu_custom_call.1} parent=11 // pred_fallthru
          _
        // Predicated region
        $region17: #{tpu_custom_call.1} parent=11 // pred_check
          %p194 = pneg %p87
        $region18: #{tpu_custom_call.1} parent=11 // pred_check_branch
          %196 = sbr.rel (%p194) target = $region20
        $region19: #{tpu_custom_call.1} parent=11 // pred_region
          _
        $region20: #{tpu_custom_call.1} parent=11 // pred_fallthru
          _
        // Predicated region
        $region21: #{tpu_custom_call.1} parent=11 // pred_check
          %p197 = pneg %p108
        $region22: #{tpu_custom_call.1} parent=11 // pred_check_branch
          %199 = sbr.rel (%p197) target = $region24
        $region23: #{tpu_custom_call.1} parent=11 // pred_region
          %201 = vsyncadd [#allocation7], 0
          %s202 = sshll.u32 %s3, 4
          %s203 = int_to_ptr.hbm [resolvable:$true] %s202
          %s204 = sshll.u32 [#allocation6], 4
          %s205 = int_to_ptr.vmem [resolvable:$true] %s204
          %210 = dma.hbm_to_vmem [thread:$0]  %s203, 256, %s205, [#allocation7], 128, 128, 8
        $region24: #{tpu_custom_call.1} parent=11 // pred_fallthru
          _
        // Predicated region
        $region25: #{tpu_custom_call.1} parent=11 // pred_check
          %p211 = pneg %p129
        $region26: #{tpu_custom_call.1} parent=11 // pred_check_branch
          %213 = sbr.rel (%p211) target = $region28
        $region27: #{tpu_custom_call.1} parent=11 // pred_region
          _
        $region28: #{tpu_custom_call.1} parent=11 // pred_fallthru
          _
        // Predicated region
        $region29: #{tpu_custom_call.1} parent=11 // pred_check
          %p214 = pneg %p150
        $region30: #{tpu_custom_call.1} parent=11 // pred_check_branch
          %216 = sbr.rel (%p214) target = $region32
        $region31: #{tpu_custom_call.1} parent=11 // pred_region
          _
        $region32: #{tpu_custom_call.1} parent=11 // pred_fallthru
          _
      $region12: #{tpu_custom_call.1} parent=5 // pred_fallthru
        _
      %p217 = scmp.lt.s32.totalorder %s19, 2
      // Predicated region
      $region33: #{tpu_custom_call.1} parent=5 // pred_check
        %p218 = pneg %p217
      $region34: #{tpu_custom_call.1} parent=5 // pred_check_branch
        %220 = sbr.rel (%p218) target = $region36
      $region35: #{tpu_custom_call.1} parent=5 // pred_region
        // Predicated region
        $region37: #{tpu_custom_call.1} parent=35 // pred_check
          %p221 = pneg %p39
        $region38: #{tpu_custom_call.1} parent=35 // pred_check_branch
          %223 = sbr.rel (%p221) target = $region40
        $region39: #{tpu_custom_call.1} parent=35 // pred_region
          %s224 = sand.u32 %s29, 1
          %s225 = scalar_lea.sflag [#allocation4], %s224
          %s226 = sand.u32 %s29, 1
          %s227 = smul.addr %s226, 32
          %s228 = scalar_lea.vmem [#allocation3], %s227
          %230 = vsyncadd %s225, 0
          %s231 = smul.addr %s19, 4
          %s232 = smul.addr %s231, 8
          %s233 = scalar_lea.hbm %s0, %s232
          %s234 = sshll.u32 %s233, 4
          %s235 = int_to_ptr.hbm [resolvable:$true] %s234
          %s236 = sshll.u32 %s228, 4
          %s237 = int_to_ptr.vmem [resolvable:$true] %s236
          %242 = dma.hbm_to_vmem [thread:$0]  %s235, 512, %s237, %s225, 256, 256, 16
        $region40: #{tpu_custom_call.1} parent=35 // pred_fallthru
          _
      $region36: #{tpu_custom_call.1} parent=5 // pred_fallthru
        _
      %p243 = scmp.le.s32.totalorder 1, %s19
      %p244 = scmp.lt.s32.totalorder %s19, 3
      %p245 = pnand %p243, %p244
      %p246 = pneg %p245
      // Predicated region
      $region41: #{tpu_custom_call.1} parent=5 // pred_check
        _
      $region42: #{tpu_custom_call.1} parent=5 // pred_check_branch
        %248 = sbr.rel (%p245) target = $region44
      $region43: #{tpu_custom_call.1} parent=5 // pred_region
        %s249 = ssub.s32 %s19, 1
        %s250 = sand.u32 %s32, 1
        %s251 = scalar_lea.sflag [#allocation4], %s250
        %s252 = sand.u32 %s32, 1
        %s253 = smul.addr %s252, 32
        %s254 = scalar_lea.vmem [#allocation3], %s253
        // Predicated region
        $region45: #{tpu_custom_call.1} parent=43 // pred_check
          %p255 = pneg %p45
        $region46: #{tpu_custom_call.1} parent=43 // pred_check_branch
          %257 = sbr.rel (%p255) target = $region48
        $region47: #{tpu_custom_call.1} parent=43 // pred_region
          %259 = dma.done %s251, 512
        $region48: #{tpu_custom_call.1} parent=43 // pred_fallthru
          _
        // Predicated region
        $region49: #{tpu_custom_call.1} parent=43 // pred_check
          %p260 = pneg %p108
        $region50: #{tpu_custom_call.1} parent=43 // pred_check_branch
          %262 = sbr.rel (%p260) target = $region52
        $region51: #{tpu_custom_call.1} parent=43 // pred_region
          %264 = dma.done [#allocation7], 256
        $region52: #{tpu_custom_call.1} parent=43 // pred_fallthru
          _
        %s265 = sand.u32 %s32, 1
        %s266 = scalar_lea.sflag [#allocation4], %s265
        %s267 = sand.u32 %s32, 1
        %s268 = smul.addr %s267, 32
        %s269 = scalar_lea.vmem [#allocation3], %s268
        %p270 = pneg %p45
        %p271 = pneg %p42
        %p272 = pneg %p66
        %p273 = pneg %p63
        %p274 = pneg %p87
        %p275 = pneg %p84
        %p276 = pneg %p108
        %p277 = pneg %p105
        %p278 = pneg %p129
        %p279 = pneg %p126
        %p280 = pneg %p150
        %p281 = pneg %p147
        %p282 = pneg %p176
        %p283 = pneg %p173
        %s284 = sand.u32 %s163, 1
        %s285 = scalar_lea.sflag [#allocation5], %s284
        %s286 = sand.u32 %s163, 1
        %s287 = smul.addr %s286, 32
        %s288 = scalar_lea.vmem [#allocation8], %s287
        %v290 = vld [vmem:[%s254] sm:$0xff]
        %v291 = vld [vmem:[%s254 + $0x8] sm:$0xff]
        %v292 = vld [vmem:[%s254 + $0x10] sm:$0xff]
        %v293 = vld [vmem:[%s254 + $0x18] sm:$0xff]
        %v294 = vld [vmem:[%s1] sm:$0xf]
        %v295 = vld [vmem:[%s1 + $0x4] sm:$0xf]
        %v296 = vpack.c.bf16 %v292, %v290
        %v297 = vpack.c.bf16 %v293, %v291
        %v298 = vld [vmem:[%s2] sm:$0xff]
        %v299 = vld [vmem:[%s2 + $0x8] sm:$0xff]
        %301 = vset.pattern.permute.xlu0 0
        %302 = vperm.xlu0 %301, %v298
        %v303 = vpop.permute.xlu0 %302
        %306 = vset.pattern.permute.xlu0 0
        %307 = vperm.xlu0 %306, %v299
        %v308 = vpop.permute.xlu0 %307
        %v312 = vunpack.c.l.b16 %v294
        %v313 = vunpack.c.l.b16 %v295
        %v314 = vpack.c.b16 %v313, %v312
        %vm315 = vcmask 130048
        %v317 = vsel %vm315, %v314, 0
        %319 = vmatpush.bf16.msra.mxu0 0
        %320 = vmatpush.bf16.msra.mxu0 0
        %321 = vmatpush.bf16.msra.mxu0 0
        %322 = vmatpush.bf16.msra.mxu0 0
        %323 = vmatpush.bf16.msra.mxu0 0
        %324 = vmatpush.bf16.msra.mxu0 0
        %325 = vmatpush.bf16.msra.mxu0 0
        %326 = vmatpush.bf16.msra.mxu0 %v296
        %327 = vmatmul.bf16.gmra.mxu0 %v317
        %v328 = vpop.f32.mrf.mxu0
        %v329 = vadd.f32 %v303, %v328
        %v330 = vpop.f32.mrf.mxu0
        %v331 = vadd.f32 %v308, %v330
        %332 = vdwg.mxu0
        %333 = vmatpush.bf16.msra.mxu0 0
        %334 = vmatpush.bf16.msra.mxu0 0
        %335 = vmatpush.bf16.msra.mxu0 0
        %336 = vmatpush.bf16.msra.mxu0 0
        %337 = vmatpush.bf16.msra.mxu0 0
        %338 = vmatpush.bf16.msra.mxu0 0
        %339 = vmatpush.bf16.msra.mxu0 0
        %340 = vmatpush.bf16.msra.mxu0 %v297
        %341 = vmatmul.bf16.gmra.mxu0 %v317
        %v342 = vpop.f32.mrf.mxu0
        %v343 = vadd.f32 %v303, %v342
        %v344 = vpop.f32.mrf.mxu0
        %v345 = vadd.f32 %v308, %v344
        %346 = vdwg.mxu0
        %vm347 = vcmp.gt.f32.partialorder %v329, 0.0
        %vm348 = vcmp.gt.f32.partialorder %v343, 0.0
        %vm349 = vcmp.gt.f32.partialorder %v331, 0.0
        %vm350 = vcmp.gt.f32.partialorder %v345, 0.0
        %v351 = vmul.f32 %v329, 0.1
        %v352 = vmul.f32 %v343, 0.1
        %v353 = vmul.f32 %v331, 0.1
        %v354 = vmul.f32 %v345, 0.1
        %v355 = vsel %vm347, %v329, %v351
        %v356 = vsel %vm348, %v343, %v352
        %v357 = vsel %vm349, %v331, %v353
        %v358 = vsel %vm350, %v345, %v354
        %359 = vrot.lane.b32.xlu0 %v355, 17
        %v360 = vpop.permute.xlu0 %359
        %361 = vrot.lane.b32.xlu0 %v357, 17
        %v362 = vpop.permute.xlu0 %361
        %363 = vrot.lane.b32.xlu0 %v356, 17
        %v364 = vpop.permute.xlu0 %363
        %365 = vrot.lane.b32.xlu0 %v358, 17
        %v366 = vpop.permute.xlu0 %365
        %v367 = vlaneseq
        %v368 = vand.u32 %v367, 127
        %vm369 = vcmp.lt.s32.totalorder %v368, 17
        %v370 = vsel %vm369, %v360, %v364
        %v371 = vsel %vm369, %v362, %v366
        %v372 = vsel %vm369, %v364, %v360
        %v373 = vsel %vm369, %v366, %v362
        %v374 = vld [vmem:[%s5] sm:$0x3]
        %v376 = vperm.slane %v374, 0
        %v377 = vperm.slane %v374, 1
        %v380 = vmul.f32 %v372, %v376
        %v381 = vmul.f32 %v370, %v377
        %v382 = vmul.f32 %v373, %v376
        %v383 = vmul.f32 %v371, %v377
        %v384 = vpack.c.bf16 %v381, %v380
        %v385 = vpack.c.bf16 %v383, %v382
        %386 = vst [vmem:[#allocation2] sm:$0xff] %v384
        %387 = vst [vmem:[#allocation2 + $0x8] sm:$0xff] %v385
        %388 = vrot.lane.b32.xlu0 %v355, 16
        %v389 = vpop.permute.xlu0 %388
        %390 = vrot.lane.b32.xlu0 %v357, 16
        %v391 = vpop.permute.xlu0 %390
        %392 = vrot.lane.b32.xlu0 %v356, 16
        %v393 = vpop.permute.xlu0 %392
        %394 = vrot.lane.b32.xlu0 %v358, 16
        %v395 = vpop.permute.xlu0 %394
        %vm396 = vcmp.lt.s32.totalorder %v368, 16
        %v397 = vsel %vm396, %v389, %v393
        %v398 = vsel %vm396, %v391, %v395
        %v399 = vsel %vm396, %v393, %v389
        %v400 = vsel %vm396, %v395, %v391
        %s401 = scalar_lea.vmem %s5, 2
        %v402 = vld [vmem:[%s401] sm:$0x3]
        %v404 = vperm.slane %v402, 0
        %v405 = vperm.slane %v402, 1
        %v408 = vmul.f32 %v399, %v404
        %v409 = vmul.f32 %v397, %v405
        %v410 = vmul.f32 %v400, %v404
        %v411 = vmul.f32 %v398, %v405
        %v412 = vpack.c.bf16 %v409, %v408
        %v413 = vpack.c.bf16 %v411, %v410
        %414 = vst [vmem:[#allocation2 + $0x10] sm:$0xff] %v412
        %415 = vst [vmem:[#allocation2 + $0x18] sm:$0xff] %v413
        %416 = vrot.lane.b32.xlu0 %v355, 15
        %v417 = vpop.permute.xlu0 %416
        %418 = vrot.lane.b32.xlu0 %v357, 15
        %v419 = vpop.permute.xlu0 %418
        %420 = vrot.lane.b32.xlu0 %v356, 15
        %v421 = vpop.permute.xlu0 %420
        %422 = vrot.lane.b32.xlu0 %v358, 15
        %v423 = vpop.permute.xlu0 %422
        %vm424 = vcmp.lt.s32.totalorder %v368, 15
        %v425 = vsel %vm424, %v417, %v421
        %v426 = vsel %vm424, %v419, %v423
        %v427 = vsel %vm424, %v421, %v417
        %v428 = vsel %vm424, %v423, %v419
        %s429 = scalar_lea.vmem %s5, 4
        %v430 = vld [vmem:[%s429] sm:$0x3]
        %v432 = vperm.slane %v430, 0
        %v433 = vperm.slane %v430, 1
        %v436 = vmul.f32 %v427, %v432
        %v437 = vmul.f32 %v425, %v433
        %v438 = vmul.f32 %v428, %v432
        %v439 = vmul.f32 %v426, %v433
        %v440 = vpack.c.bf16 %v437, %v436
        %v441 = vpack.c.bf16 %v439, %v438
        %442 = vst [vmem:[#allocation2 + $0x20] sm:$0xff] %v440
        %443 = vst [vmem:[#allocation2 + $0x28] sm:$0xff] %v441
        %444 = vrot.lane.b32.xlu0 %v355, 1
        %v445 = vpop.permute.xlu0 %444
        %446 = vrot.lane.b32.xlu0 %v357, 1
        %v447 = vpop.permute.xlu0 %446
        %448 = vrot.lane.b32.xlu0 %v356, 1
        %v449 = vpop.permute.xlu0 %448
        %450 = vrot.lane.b32.xlu0 %v358, 1
        %v451 = vpop.permute.xlu0 %450
        %vm452 = vcmp.lt.s32.totalorder %v368, 1
        %v453 = vsel %vm452, %v445, %v449
        %v454 = vsel %vm452, %v447, %v451
        %v455 = vsel %vm452, %v449, %v445
        %v456 = vsel %vm452, %v451, %v447
        %s457 = scalar_lea.vmem %s5, 6
        %v458 = vld [vmem:[%s457] sm:$0x3]
        %v460 = vperm.slane %v458, 0
        %v461 = vperm.slane %v458, 1
        %v464 = vmul.f32 %v455, %v460
        %v465 = vmul.f32 %v453, %v461
        %v466 = vmul.f32 %v456, %v460
        %v467 = vmul.f32 %v454, %v461
        %v468 = vpack.c.bf16 %v465, %v464
        %v469 = vpack.c.bf16 %v467, %v466
        %470 = vst [vmem:[#allocation2 + $0x30] sm:$0xff] %v468
        %471 = vst [vmem:[#allocation2 + $0x38] sm:$0xff] %v469
        %v472 = vpack.c.bf16 %v356, %v355
        %v473 = vpack.c.bf16 %v358, %v357
        %474 = vst [vmem:[#allocation2 + $0x40] sm:$0xff] %v472
        %475 = vst [vmem:[#allocation2 + $0x48] sm:$0xff] %v473
        %476 = vrot.lane.b32.xlu0 %v355, 127
        %v477 = vpop.permute.xlu0 %476
        %478 = vrot.lane.b32.xlu0 %v357, 127
        %v479 = vpop.permute.xlu0 %478
        %480 = vrot.lane.b32.xlu0 %v356, 127
        %v481 = vpop.permute.xlu0 %480
        %482 = vrot.lane.b32.xlu0 %v358, 127
        %v483 = vpop.permute.xlu0 %482
        %vm484 = vcmp.lt.s32.totalorder %v368, 127
        %v485 = vsel %vm484, %v477, %v481
        %v486 = vsel %vm484, %v479, %v483
        %v487 = vsel %vm484, %v481, %v477
        %v488 = vsel %vm484, %v483, %v479
        %s489 = scalar_lea.vmem %s5, 10
        %v490 = vld [vmem:[%s489] sm:$0x3]
        %v492 = vperm.slane %v490, 0
        %v493 = vperm.slane %v490, 1
        %v496 = vmul.f32 %v485, %v492
        %v497 = vmul.f32 %v487, %v493
        %v498 = vmul.f32 %v486, %v492
        %v499 = vmul.f32 %v488, %v493
        %v500 = vpack.c.bf16 %v497, %v496
        %v501 = vpack.c.bf16 %v499, %v498
        %502 = vst [vmem:[#allocation2 + $0x50] sm:$0xff] %v500
        %503 = vst [vmem:[#allocation2 + $0x58] sm:$0xff] %v501
        %504 = vrot.lane.b32.xlu0 %v355, 113
        %v505 = vpop.permute.xlu0 %504
        %506 = vrot.lane.b32.xlu0 %v357, 113
        %v507 = vpop.permute.xlu0 %506
        %508 = vrot.lane.b32.xlu0 %v356, 113
        %v509 = vpop.permute.xlu0 %508
        %510 = vrot.lane.b32.xlu0 %v358, 113
        %v511 = vpop.permute.xlu0 %510
        %vm512 = vcmp.lt.s32.totalorder %v368, 113
        %v513 = vsel %vm512, %v505, %v509
        %v514 = vsel %vm512, %v507, %v511
        %v515 = vsel %vm512, %v509, %v505
        %v516 = vsel %vm512, %v511, %v507
        %s517 = scalar_lea.vmem %s5, 12
        %v518 = vld [vmem:[%s517] sm:$0x3]
        %v520 = vperm.slane %v518, 0
        %v521 = vperm.slane %v518, 1
        %v524 = vmul.f32 %v513, %v520
        %v525 = vmul.f32 %v515, %v521
        %v526 = vmul.f32 %v514, %v520
        %v527 = vmul.f32 %v516, %v521
        %v528 = vpack.c.bf16 %v525, %v524
        %v529 = vpack.c.bf16 %v527, %v526
        %530 = vst [vmem:[#allocation2 + $0x60] sm:$0xff] %v528
        %531 = vst [vmem:[#allocation2 + $0x68] sm:$0xff] %v529
        %532 = vrot.lane.b32.xlu0 %v355, 112
        %v533 = vpop.permute.xlu0 %532
        %534 = vrot.lane.b32.xlu0 %v357, 112
        %v535 = vpop.permute.xlu0 %534
        %536 = vrot.lane.b32.xlu0 %v356, 112
        %v537 = vpop.permute.xlu0 %536
        %538 = vrot.lane.b32.xlu0 %v358, 112
        %v539 = vpop.permute.xlu0 %538
        %vm540 = vcmp.lt.s32.totalorder %v368, 112
        %v541 = vsel %vm540, %v533, %v537
        %v542 = vsel %vm540, %v535, %v539
        %v543 = vsel %vm540, %v537, %v533
        %v544 = vsel %vm540, %v539, %v535
        %s545 = scalar_lea.vmem %s5, 14
        %v546 = vld [vmem:[%s545] sm:$0x3]
        %v548 = vperm.slane %v546, 0
        %v549 = vperm.slane %v546, 1
        %v552 = vmul.f32 %v541, %v548
        %v553 = vmul.f32 %v543, %v549
        %v554 = vmul.f32 %v542, %v548
        %v555 = vmul.f32 %v544, %v549
        %v556 = vpack.c.bf16 %v553, %v552
        %v557 = vpack.c.bf16 %v555, %v554
        %558 = vst [vmem:[#allocation2 + $0x70] sm:$0xff] %v556
        %559 = vst [vmem:[#allocation2 + $0x78] sm:$0xff] %v557
        %560 = vrot.lane.b32.xlu0 %v355, 111
        %v561 = vpop.permute.xlu0 %560
        %562 = vrot.lane.b32.xlu0 %v357, 111
        %v563 = vpop.permute.xlu0 %562
        %564 = vrot.lane.b32.xlu0 %v356, 111
        %v565 = vpop.permute.xlu0 %564
        %566 = vrot.lane.b32.xlu0 %v358, 111
        %v567 = vpop.permute.xlu0 %566
        %vm568 = vcmp.lt.s32.totalorder %v368, 111
        %v569 = vsel %vm568, %v561, %v565
        %v570 = vsel %vm568, %v563, %v567
        %v571 = vsel %vm568, %v565, %v561
        %v572 = vsel %vm568, %v567, %v563
        %s573 = scalar_lea.vmem %s5, 16
        %v574 = vld [vmem:[%s573] sm:$0x3]
        %v576 = vperm.slane %v574, 0
        %v577 = vperm.slane %v574, 1
        %v580 = vmul.f32 %v569, %v576
        %v581 = vmul.f32 %v571, %v577
        %v582 = vmul.f32 %v570, %v576
        %v583 = vmul.f32 %v572, %v577
        %v584 = vpack.c.bf16 %v581, %v580
        %v585 = vpack.c.bf16 %v583, %v582
        %586 = vst [vmem:[#allocation2 + $0x80] sm:$0xff] %v584
        %587 = vst [vmem:[#allocation2 + $0x88] sm:$0xff] %v585
        %v588 = vld [vmem:[#allocation6] sm:$0xff]
        %v589 = vld [vmem:[#allocation6 + $0x8] sm:$0xff]
        %v590 = vld [vmem:[#allocation2] sm:$0xff]
        %v591 = vld [vmem:[#allocation2 + $0x8] sm:$0xff]
        %v592 = vld [vmem:[#allocation2 + $0x10] sm:$0xff]
        %v593 = vld [vmem:[#allocation2 + $0x18] sm:$0xff]
        %v594 = vld [vmem:[#allocation2 + $0x20] sm:$0xff]
        %v595 = vld [vmem:[#allocation2 + $0x28] sm:$0xff]
        %v596 = vld [vmem:[#allocation2 + $0x30] sm:$0xff]
        %v597 = vld [vmem:[#allocation2 + $0x38] sm:$0xff]
        %v598 = vld [vmem:[#allocation2 + $0x40] sm:$0xff]
        %v599 = vld [vmem:[#allocation2 + $0x48] sm:$0xff]
        %v600 = vld [vmem:[#allocation2 + $0x50] sm:$0xff]
        %v601 = vld [vmem:[#allocation2 + $0x58] sm:$0xff]
        %v602 = vld [vmem:[#allocation2 + $0x60] sm:$0xff]
        %v603 = vld [vmem:[#allocation2 + $0x68] sm:$0xff]
        %v604 = vld [vmem:[#allocation2 + $0x70] sm:$0xff]
        %v605 = vld [vmem:[#allocation2 + $0x78] sm:$0xff]
        %v606 = vld [vmem:[#allocation2 + $0x80] sm:$0xff]
        %v607 = vld [vmem:[#allocation2 + $0x88] sm:$0xff]
        %v608 = vld [vmem:[%s4] sm:$0xff]
        %v609 = vld [vmem:[%s4 + $0x8] sm:$0xff]
        %611 = vset.pattern.permute.xlu0 0
        %612 = vperm.xlu0 %611, %v608
        %v613 = vpop.permute.xlu0 %612
        %616 = vset.pattern.permute.xlu0 0
        %617 = vperm.xlu0 %616, %v609
        %v618 = vpop.permute.xlu0 %617
        %v622 = vunpack.c.l.b16 %v588
        %v623 = vunpack.c.h.b16 %v588
        %v624 = vunpack.c.l.b16 %v589
        %v625 = vunpack.c.h.b16 %v589
        %v626 = vpack.c.b16 %v624, %v622
        %v627 = vpack.c.b16 %v625, %v623
        %v647 = vunpack.c.l.b16 %v590
        %v648 = vunpack.c.h.b16 %v590
        %v649 = vunpack.c.l.b16 %v591
        %v650 = vunpack.c.h.b16 %v591
        %v651 = vunpack.c.l.b16 %v592
        %v652 = vunpack.c.h.b16 %v592
        %v653 = vunpack.c.l.b16 %v593
        %v654 = vunpack.c.h.b16 %v593
        %v655 = vunpack.c.l.b16 %v594
        %v656 = vunpack.c.h.b16 %v594
        %v657 = vunpack.c.l.b16 %v595
        %v658 = vunpack.c.h.b16 %v595
        %v659 = vunpack.c.l.b16 %v596
        %v660 = vunpack.c.h.b16 %v596
        %v661 = vunpack.c.l.b16 %v597
        %v662 = vunpack.c.h.b16 %v597
        %v663 = vunpack.c.l.b16 %v598
        %v664 = vunpack.c.h.b16 %v598
        %v665 = vunpack.c.l.b16 %v599
        %v666 = vunpack.c.h.b16 %v599
        %v667 = vunpack.c.l.b16 %v600
        %v668 = vunpack.c.h.b16 %v600
        %v669 = vunpack.c.l.b16 %v601
        %v670 = vunpack.c.h.b16 %v601
        %v671 = vunpack.c.l.b16 %v602
        %v672 = vunpack.c.h.b16 %v602
        %v673 = vunpack.c.l.b16 %v603
        %v674 = vunpack.c.h.b16 %v603
        %v675 = vunpack.c.l.b16 %v604
        %v676 = vunpack.c.h.b16 %v604
        %v677 = vunpack.c.l.b16 %v605
        %v678 = vunpack.c.h.b16 %v605
        %v679 = vunpack.c.l.b16 %v606
        %v680 = vunpack.c.h.b16 %v606
        %v681 = vunpack.c.l.b16 %v607
        %v682 = vunpack.c.h.b16 %v607
        %v683 = vpack.c.b16 %v649, %v647
        %v684 = vpack.c.b16 %v650, %v648
        %v685 = vpack.c.b16 %v653, %v651
        %v686 = vpack.c.b16 %v654, %v652
        %v687 = vpack.c.b16 %v657, %v655
        %v688 = vpack.c.b16 %v658, %v656
        %v689 = vpack.c.b16 %v661, %v659
        %v690 = vpack.c.b16 %v662, %v660
        %v691 = vpack.c.b16 %v665, %v663
        %v692 = vpack.c.b16 %v666, %v664
        %v693 = vpack.c.b16 %v669, %v667
        %v694 = vpack.c.b16 %v670, %v668
        %v695 = vpack.c.b16 %v673, %v671
        %v696 = vpack.c.b16 %v674, %v672
        %v697 = vpack.c.b16 %v677, %v675
        %v698 = vpack.c.b16 %v678, %v676
        %v699 = vpack.c.b16 %v681, %v679
        %v700 = vpack.c.b16 %v682, %v680
        %v720 = vsel %vm315, %v627, 0
        %722 = vmatpush.bf16.msra.mxu0 %v697
        %723 = vmatpush.bf16.msra.mxu0 %v695
        %724 = vmatpush.bf16.msra.mxu0 %v693
        %725 = vmatpush.bf16.msra.mxu0 %v691
        %726 = vmatpush.bf16.msra.mxu0 %v689
        %727 = vmatpush.bf16.msra.mxu0 %v687
        %728 = vmatpush.bf16.msra.mxu0 %v685
        %729 = vmatpush.bf16.msra.mxu0 %v683
        %730 = vmatmul.bf16.gmra.mxu0 %v626
        %v731 = vpop.f32.mrf.mxu0
        %v732 = vadd.f32 %v613, %v731
        %v733 = vpop.f32.mrf.mxu0
        %v734 = vadd.f32 %v618, %v733
        %735 = vdwg.mxu0
        %736 = vmatpush.bf16.msra.mxu0 0
        %737 = vmatpush.bf16.msra.mxu0 0
        %738 = vmatpush.bf16.msra.mxu0 0
        %739 = vmatpush.bf16.msra.mxu0 0
        %740 = vmatpush.bf16.msra.mxu0 0
        %741 = vmatpush.bf16.msra.mxu0 0
        %742 = vmatpush.bf16.msra.mxu0 0
        %743 = vmatpush.bf16.msra.mxu0 %v699
        %744 = vmatmul.bf16.gmra.mxu0 %v720
        %v745 = vpop.f32.mrf.mxu0
        %v746 = vadd.f32 %v732, %v745
        %v747 = vpop.f32.mrf.mxu0
        %v748 = vadd.f32 %v734, %v747
        %749 = vdwg.mxu0
        %750 = vmatpush.bf16.msra.mxu0 %v698
        %751 = vmatpush.bf16.msra.mxu0 %v696
        %752 = vmatpush.bf16.msra.mxu0 %v694
        %753 = vmatpush.bf16.msra.mxu0 %v692
        %754 = vmatpush.bf16.msra.mxu0 %v690
        %755 = vmatpush.bf16.msra.mxu0 %v688
        %756 = vmatpush.bf16.msra.mxu0 %v686
        %757 = vmatpush.bf16.msra.mxu0 %v684
        %758 = vmatmul.bf16.gmra.mxu0 %v626
        %v759 = vpop.f32.mrf.mxu0
        %v760 = vadd.f32 %v613, %v759
        %v761 = vpop.f32.mrf.mxu0
        %v762 = vadd.f32 %v618, %v761
        %763 = vdwg.mxu0
        %764 = vmatpush.bf16.msra.mxu0 0
        %765 = vmatpush.bf16.msra.mxu0 0
        %766 = vmatpush.bf16.msra.mxu0 0
        %767 = vmatpush.bf16.msra.mxu0 0
        %768 = vmatpush.bf16.msra.mxu0 0
        %769 = vmatpush.bf16.msra.mxu0 0
        %770 = vmatpush.bf16.msra.mxu0 0
        %771 = vmatpush.bf16.msra.mxu0 %v700
        %772 = vmatmul.bf16.gmra.mxu0 %v720
        %v773 = vpop.f32.mrf.mxu0
        %v774 = vadd.f32 %v760, %v773
        %v775 = vpop.f32.mrf.mxu0
        %v776 = vadd.f32 %v762, %v775
        %777 = vdwg.mxu0
        %vm778 = vcmp.gt.f32.partialorder %v746, 0.0
        %vm779 = vcmp.gt.f32.partialorder %v774, 0.0
        %vm780 = vcmp.gt.f32.partialorder %v748, 0.0
        %vm781 = vcmp.gt.f32.partialorder %v776, 0.0
        %v782 = vmul.f32 %v746, 0.1
        %v783 = vmul.f32 %v774, 0.1
        %v784 = vmul.f32 %v748, 0.1
        %v785 = vmul.f32 %v776, 0.1
        %v786 = vsel %vm778, %v746, %v782
        %v787 = vsel %vm779, %v774, %v783
        %v788 = vsel %vm780, %v748, %v784
        %v789 = vsel %vm781, %v776, %v785
        %v790 = vadd.f32 %v786, %v290
        %v791 = vadd.f32 %v787, %v291
        %v792 = vadd.f32 %v788, %v292
        %v793 = vadd.f32 %v789, %v293
        %794 = vst [vmem:[%s288] sm:$0xff] %v790
        %795 = vst [vmem:[%s288 + $0x8] sm:$0xff] %v791
        %796 = vst [vmem:[%s288 + $0x10] sm:$0xff] %v792
        %797 = vst [vmem:[%s288 + $0x18] sm:$0xff] %v793
        %s798 = sand.u32 %s163, 1
        %s799 = scalar_lea.sflag [#allocation5], %s798
        %s800 = sand.u32 %s163, 1
        %s801 = smul.addr %s800, 32
        %s802 = scalar_lea.vmem [#allocation8], %s801
        // Predicated region
        $region53: #{tpu_custom_call.1} parent=43 // pred_check
          %p803 = pneg %p173
        $region54: #{tpu_custom_call.1} parent=43 // pred_check_branch
          %805 = sbr.rel (%p803) target = $region56
        $region55: #{tpu_custom_call.1} parent=43 // pred_region
          %807 = vsyncadd %s799, 0
          %s808 = smul.addr %s24, 4
          %s809 = smul.addr %s808, 8
          %s810 = scalar_lea.hbm %s6, %s809
          %s811 = sshll.u32 %s802, 4
          %s812 = int_to_ptr.vmem [resolvable:$true] %s811
          %s813 = sshll.u32 %s810, 4
          %s814 = int_to_ptr.hbm [resolvable:$true] %s813
          %819 = dma.vmem_to_hbm [thread:$0]  %s812, 512, %s814, %s799, 256, 256, 16
        $region56: #{tpu_custom_call.1} parent=43 // pred_fallthru
          _
      $region44: #{tpu_custom_call.1} parent=5 // pred_fallthru
        _
      %p820 = scmp.le.s32.totalorder 2, %s19
      // Predicated region
      $region57: #{tpu_custom_call.1} parent=5 // pred_check
        %p821 = pneg %p820
      $region58: #{tpu_custom_call.1} parent=5 // pred_check_branch
        %823 = sbr.rel (%p821) target = $region60
      $region59: #{tpu_custom_call.1} parent=5 // pred_region
        %s824 = ssub.s32 %s19, 2
        // Predicated region
        $region61: #{tpu_custom_call.1} parent=59 // pred_check
          %p825 = pneg %p179
        $region62: #{tpu_custom_call.1} parent=59 // pred_check_branch
          %827 = sbr.rel (%p825) target = $region64
        $region63: #{tpu_custom_call.1} parent=59 // pred_region
          %s828 = sand.u32 %s164, 1
          %s829 = scalar_lea.sflag [#allocation5], %s828
          %s830 = sand.u32 %s164, 1
          %s831 = smul.addr %s830, 32
          %s832 = scalar_lea.vmem [#allocation8], %s831
          %834 = dma.done %s829, 512
        $region64: #{tpu_custom_call.1} parent=59 // pred_fallthru
          _
      $region60: #{tpu_custom_call.1} parent=5 // pred_fallthru
        _
    $region6: #{tpu_custom_call.1} parent=1 // loop_footer
      %s23 = sadd.s32 1, %s19
    $region7: #{tpu_custom_call.1} parent=1 // loop_footer_branch
      %18 = sbr.rel target = $region3
    $region8: #{tpu_custom_call.1} parent=1 // loop_exit
      _
    %835 = vsyncpa [#allocation4], 1
    %s836 = scalar_lea.sflag [#allocation4], 1
    %837 = vsyncpa %s836, 1
    %838 = vsyncpa [#allocation7], 1
    %839 = vsyncpa [#allocation5], 1
    %s840 = scalar_lea.sflag [#allocation5], 1
    %841 = vsyncpa %s840, 1

</llo_original>
